<compile_context>
chip_gen: v7x
topology: tpu7x:2x2x1
jax: 0.10.0
libtpu: 0.0.40
codegen_flags: <defaults>
</compile_context>

<pallas_src>
import functools

import jax
import jax.numpy as jnp
from jax import lax
from jax.experimental import pallas as pl
from jax.experimental.pallas import tpu as pltpu

# ----------------------------------------------------------------------------
# Sizes (synthetic).  `extended_voc_sz` in the reference is interpreted as the
# number of OOV slots appended after the base vocabulary.
VOC = 32
N_OOV = 16
EXT_VOC = VOC + N_OOV
EXT_PAD = ((EXT_VOC + 127) // 128) * 128     # lane-dense kernel output width
EMB = 32
HID = 32
NEG_INF = -1e30


# ----------------------------------------------------------------------------
# Fused Pallas kernel: attention + context + heads + pointer-generator mixture.
def _fused_pointer_gen_kernel(dec_ref, enc_ref, mask_ref, rhs_ref,
                              wdec_ref, wctx_ref, bh_ref, out_ref,
                              *, n_agents, src_len):
    """One grid step = B_PER batch elements; all agents handled in-kernel.

    dec_ref  : (B_PER, tgt, HID)               bf16 decoder states
    enc_ref  : (B_PER, n_agents*src, HID)      bf16 encoder states (agents stacked)
    mask_ref : (B_PER, 1, n_agents*src)        f32  additive attention mask (0 / -1e30)
    rhs_ref  : (B_PER, n_agents*src+VOC, 128)  bf16 [one-hot(article) ; I_voc] RHS
    wdec_ref : (HID, VOC+2)  bf16 fused head weights, decoder half
    wctx_ref : (HID, VOC+2)  bf16 fused head weights, context half
    bh_ref   : (1, VOC+2)    f32  fused head bias
    out_ref  : (B_PER, tgt, 128) f32 padded extended-vocab probabilities
    """
    b_per, tgt_len, hid = dec_ref.shape
    ka = n_agents * src_len
    voc = wdec_ref.shape[1] - 2

    dec = dec_ref[...]                       # (B_PER, tgt, HID)  bf16
    enc = enc_ref[...]                       # (B_PER, ka, HID)   bf16
    w_ctx = wctx_ref[...]                    # (HID, VOC+2)       bf16

    # Fused heads (vocab / p_gen / agent), decoder half: one batched MXU call
    # over all B_PER*tgt rows.
    head_dec_all = jnp.dot(dec.reshape(b_per * tgt_len, hid), wdec_ref[...],
                           preferred_element_type=jnp.float32) + bh_ref[...]

    # All agents' attention scores in one batched MXU call; agents stacked along
    # the lane axis.  The additive length mask is precomputed in the wrapper.
    scores = jnp.einsum('btd,bkd->btk', dec, enc,
                        preferred_element_type=jnp.float32) + mask_ref[...]
    # Per-row max over ALL lanes: constant within each agent segment, so the
    # per-agent softmax is mathematically unchanged; avoids per-segment
    # (relayout-heavy) reductions.  Masked lanes become exactly 0 after exp.
    p_all = jnp.exp(scores - jnp.max(scores, axis=-1, keepdims=True))

    # Lane -> agent-segment selector; computed once per grid step.
    lane_i = lax.broadcasted_iota(jnp.int32, (tgt_len, ka), 1)

    for b in range(b_per):                   # static unroll — b_per is 1 or 2
        head_dec = head_dec_all[b * tgt_len:(b + 1) * tgt_len]      # (tgt, VOC+2)
        inv_att, p_gens, voc_gens, agt_logits = [], [], [], []
        # TODO(synk): for large n_agents switch to an online (running-max)
        # agent-softmax accumulation instead of these per-agent lists.
        for a in range(n_agents):            # static unroll — n_agents is tiny
            lo = a * src_len
            p_a = p_all[b, :, lo:lo + src_len]                      # (tgt, src)
            denom = jnp.maximum(jnp.sum(p_a, axis=-1, keepdims=True), 1e-20)
            inv = pl.reciprocal(denom, approx=True)
            attn = p_a * inv                                        # (tgt, src)

            enc_a = enc[b, lo:lo + src_len, :]                      # (src, HID)
            ctx = jnp.dot(attn.astype(jnp.bfloat16), enc_a,
                          preferred_element_type=jnp.float32)       # (tgt, HID)

            # fused heads: [dec; ctx] @ W  ==  dec @ W_top + ctx @ W_bot
            head = head_dec + jnp.dot(ctx.astype(jnp.bfloat16), w_ctx,
                                      preferred_element_type=jnp.float32)
            voc_logits = head[:, :voc]
            gen_logit = head[:, voc:voc + 1]
            agt_logits.append(head[:, voc + 1:voc + 2])

            p_gen = pl.reciprocal(1.0 + jnp.exp(-gen_logit), approx=True)
            pv = jnp.exp(voc_logits - jnp.max(voc_logits, axis=-1, keepdims=True))
            p_voc = pv * pl.reciprocal(jnp.sum(pv, axis=-1, keepdims=True),
                                       approx=True)
            inv_att.append(inv)
            p_gens.append(p_gen)
            voc_gens.append(p_gen * p_voc)                          # (tgt, VOC)

        # softmax over agents (exact reciprocal keeps output rows ~normalized)
        m_a = agt_logits[0]
        for l in agt_logits[1:]:
            m_a = jnp.maximum(m_a, l)
        exps = [jnp.exp(l - m_a) for l in agt_logits]
        den_a = exps[0]
        for e in exps[1:]:
            den_a = den_a + e
        inv_a = pl.reciprocal(den_a, approx=False)

        gen_sum = (exps[0] * inv_a) * voc_gens[0]
        coefs = [(exps[0] * inv_a) * (1.0 - p_gens[0]) * inv_att[0]]
        for a in range(1, n_agents):
            w_a = exps[a] * inv_a
            gen_sum = gen_sum + w_a * voc_gens[a]
            coefs.append(w_a * (1.0 - p_gens[a]) * inv_att[a])

        # Copy part of the mixture rebuilt lane-dense straight from p_all:
        #   copy[t, a*src+s] = w_a * (1 - p_gen_a) * attn_a[t, s]
        coef_full = coefs[n_agents - 1]
        for a in range(n_agents - 2, -1, -1):
            coef_full = jnp.where(lane_i < (a + 1) * src_len, coefs[a], coef_full)
        copy_full = p_all[b] * coef_full                             # (tgt, ka)

        # Fused pointer-generator mixture: two wide lane-dense MXU calls against
        # the precomputed [one-hot(article) ; I_voc] RHS (== the scatter_add).
        rhs = rhs_ref[b]                                             # (ka+VOC, 128)
        out_ref[b] = (
            jnp.dot(copy_full.astype(jnp.bfloat16), rhs[:ka],
                    preferred_element_type=jnp.float32)
            + jnp.dot(gen_sum.astype(jnp.bfloat16), rhs[ka:],
                      preferred_element_type=jnp.float32))


def fused_pointer_generator(dec_states, enc_seq, article_ids, lengths,
                            w_head_dec, w_head_ctx, b_head):
    """dec_states: [bsz, tgt, HID] f32, enc_seq: [bsz, n_agents, src, HID] f32,
       article_ids: [bsz, n_agents, src] int32, lengths: [bsz*n_agents] int32."""
    bsz, tgt_len, hid = dec_states.shape
    _, n_agents, src_len, _ = enc_seq.shape
    ka = n_agents * src_len
    nh = w_head_dec.shape[1]

    # Whole batch folded into the blocks; keep a 2-way "parallel" split so both
    # TensorCores get work on v7x (on v5e/v6e this is at most a 2-step loop).
    n_splits = 2 if bsz % 2 == 0 else 1
    b_per = bsz // n_splits

    # ---- hoisted, lane-dense kernel inputs (computed once, in the wrapper) ----
    dec_bf = dec_states.astype(jnp.bfloat16)
    enc_flat = enc_seq.reshape(bsz, ka, hid).astype(jnp.bfloat16)
    # additive attention mask (0 valid / NEG_INF padding), agents stacked on lanes
    lens = lengths.reshape(bsz, n_agents)
    valid = (jnp.arange(src_len, dtype=jnp.int32)[None, None, :] < lens[:, :, None])
    mask_add = jnp.where(valid, 0.0, NEG_INF).astype(jnp.float32).reshape(bsz, 1, ka)
    # mixture RHS: [one-hot(article ids) ; I_voc]  (scatter_add as a matmul)
    onehot = jax.nn.one_hot(article_ids.reshape(bsz, ka), EXT_PAD, dtype=jnp.float32)
    eye = jnp.broadcast_to(jnp.eye(VOC, EXT_PAD, dtype=jnp.float32)[None],
                           (bsz, VOC, EXT_PAD))
    mix_rhs = jnp.concatenate([onehot, eye], axis=1).astype(jnp.bfloat16)

    kernel = functools.partial(_fused_pointer_gen_kernel,
                               n_agents=n_agents, src_len=src_len)

    return pl.pallas_call(
        kernel,
        out_shape=jax.ShapeDtypeStruct((bsz, tgt_len, EXT_PAD), jnp.float32),
        grid=(n_splits,),
        in_specs=[
            pl.BlockSpec((b_per, tgt_len, hid), lambda i: (i, 0, 0)),
            pl.BlockSpec((b_per, ka, hid), lambda i: (i, 0, 0)),
            pl.BlockSpec((b_per, 1, ka), lambda i: (i, 0, 0)),
            pl.BlockSpec((b_per, ka + VOC, EXT_PAD), lambda i: (i, 0, 0)),
            pl.BlockSpec((hid, nh), lambda i: (0, 0)),
            pl.BlockSpec((hid, nh), lambda i: (0, 0)),
            pl.BlockSpec((1, nh), lambda i: (0, 0)),
        ],
        out_specs=pl.BlockSpec((b_per, tgt_len, EXT_PAD), lambda i: (i, 0, 0)),
        compiler_params=pltpu.CompilerParams(
            dimension_semantics=("parallel",)),
    )(dec_bf, enc_flat, mask_add, mix_rhs,
      w_head_dec.astype(jnp.bfloat16), w_head_ctx.astype(jnp.bfloat16), b_head)


# ----------------------------------------------------------------------------
# Plain-JAX glue: embeddings, simplified masked RNN encoder/decoder.
# TODO(synk): MultiAgentsEncoder / Decoder are undefined in the reference;
# pack_padded_sequence is replaced by explicit length masking.
def _masked_rnn(x, lengths, h0, w_ih, w_hh, b):
    """x: [T, B, EMB], lengths: [B], h0: [B, HID] -> (outs [T,B,HID], h_last)."""
    def step(h, inp):
        x_t, t = inp
        h_new = jnp.tanh(x_t @ w_ih + h @ w_hh + b)
        valid = (t < lengths)[:, None].astype(jnp.float32)
        h = valid * h_new + (1.0 - valid) * h
        return h, h * valid

    h_last, outs = lax.scan(step, h0, (x, jnp.arange(x.shape[0])))
    return outs, h_last


def multi_agents_summarizer(params, article, article_length,
                            prev_input, prev_input_length):
    """article: [src_len, bsz, n_agents] int32 (extended-vocab ids)
       article_length: [bsz * n_agents] int32
       prev_input: [tgt_len, bsz] int32 (base-vocab ids)
       prev_input_length: [bsz] int32
       returns: [tgt_len, bsz, EXT_VOC] f32."""
    src_len, bsz, n_agents = article.shape
    emb = params["embedding"]

    emb_article = emb[article.reshape(src_len, bsz * n_agents)]     # [src, B*A, EMB]
    emb_prev = emb[prev_input]                                       # [tgt, bsz, EMB]

    enc_outs, enc_last = _masked_rnn(
        emb_article, article_length,
        jnp.zeros((bsz * n_agents, HID), jnp.float32),
        params["enc_Wih"], params["enc_Whh"], params["enc_b"])
    enc_seq = enc_outs.reshape(src_len, bsz, n_agents, HID).transpose(1, 2, 0, 3)
    init_state = enc_last.reshape(bsz, n_agents, HID).mean(axis=1)   # [bsz, HID]

    dec_outs, _ = _masked_rnn(
        emb_prev, prev_input_length, init_state,
        params["dec_Wih"], params["dec_Whh"], params["dec_b"])
    dec_states = dec_outs.transpose(1, 0, 2)                          # [bsz, tgt, HID]

    # Split the concat-style head weights (dc = [dec; ctx]) into top/bottom
    # halves and fuse vocab / p_gen / agent heads into one (HID, VOC+2) matmul.
    w_head_dec = jnp.concatenate([params["W_voc"][:HID], params["w_gen"][:HID],
                                  params["w_agt"][:HID]], axis=1)
    w_head_ctx = jnp.concatenate([params["W_voc"][HID:], params["w_gen"][HID:],
                                  params["w_agt"][HID:]], axis=1)
    b_head = jnp.concatenate([params["b_voc"], params["b_gen"],
                              params["b_agt"]])[None, :]

    article_ids = article.transpose(1, 2, 0).astype(jnp.int32)        # [b, a, src]

    out_pad = fused_pointer_generator(dec_states, enc_seq, article_ids,
                                      article_length.astype(jnp.int32),
                                      w_head_dec, w_head_ctx, b_head)  # [b,t,128]
    # drop the lane padding, go to the PyTorch [tgt, bsz, EXT_VOC] convention
    return out_pad[:, :, :EXT_VOC].transpose(1, 0, 2)


# ----------------------------------------------------------------------------
# Pure-JAX reference of the same forward pass (for validation).
def multi_agents_summarizer_reference(params, article, article_length,
                                      prev_input, prev_input_length):
    hp = jax.lax.Precision.HIGHEST
    src_len, bsz, n_agents = article.shape
    tgt_len = prev_input.shape[0]
    emb = params["embedding"]

    emb_article = emb[article.reshape(src_len, bsz * n_agents)]
    emb_prev = emb[prev_input]
    enc_outs, enc_last = _masked_rnn(
        emb_article, article_length,
        jnp.zeros((bsz * n_agents, HID), jnp.float32),
        params["enc_Wih"], params["enc_Whh"], params["enc_b"])
    enc_seq = enc_outs.reshape(src_len, bsz, n_agents, HID).transpose(1, 2, 0, 3)
    init_state = enc_last.reshape(bsz, n_agents, HID).mean(axis=1)
    dec_outs, _ = _masked_rnn(
        emb_prev, prev_input_length, init_state,
        params["dec_Wih"], params["dec_Whh"], params["dec_b"])
    dec_states = dec_outs.transpose(1, 0, 2)

    scores = jnp.einsum('btd,basd->bats', dec_states, enc_seq, precision=hp)
    lens = article_length.reshape(bsz, n_agents)
    mask = jnp.arange(src_len)[None, None, None, :] < lens[:, :, None, None]
    attn = jax.nn.softmax(jnp.where(mask, scores, NEG_INF), axis=-1)
    ctx = jnp.einsum('bats,basd->batd', attn, enc_seq, precision=hp)

    d_b = jnp.broadcast_to(dec_states[:, None], (bsz, n_agents, tgt_len, HID))
    dc = jnp.concatenate([d_b, ctx], axis=-1)
    p_gen = jax.nn.sigmoid(
        jnp.einsum('batk,ko->bato', dc, params["w_gen"], precision=hp) + params["b_gen"])
    p_vocab = jax.nn.softmax(
        jnp.einsum('batk,kv->batv', dc, params["W_voc"], precision=hp) + params["b_voc"],
        axis=-1)
    voc_gen = p_gen * p_vocab
    copy_w = (1.0 - p_gen) * attn
    agent_logits = (jnp.einsum('batk,ko->bato', dc, params["w_agt"], precision=hp)
                    + params["b_agt"])[..., 0]
    agent_attn = jax.nn.softmax(agent_logits, axis=1)[..., None]

    onehot = jax.nn.one_hot(article.transpose(1, 2, 0), EXT_VOC, dtype=jnp.float32)
    copy_dist = jnp.einsum('bats,basv->batv', copy_w, onehot, precision=hp)
    ext_gen = jnp.pad(voc_gen, ((0, 0), (0, 0), (0, 0), (0, EXT_VOC - VOC)))
    out = jnp.sum(agent_attn * (ext_gen + copy_dist), axis=1)
    return out.transpose(1, 0, 2)


def init_params(key):
    ks = jax.random.split(key, 8)
    s = 0.1
    return {
        "embedding": s * jax.random.normal(ks[0], (EXT_VOC, EMB), jnp.float32),
        "enc_Wih": s * jax.random.normal(ks[1], (EMB, HID), jnp.float32),
        "enc_Whh": s * jax.random.normal(ks[2], (HID, HID), jnp.float32),
        "enc_b": jnp.zeros((HID,), jnp.float32),
        "dec_Wih": s * jax.random.normal(ks[3], (EMB, HID), jnp.float32),
        "dec_Whh": s * jax.random.normal(ks[4], (HID, HID), jnp.float32),
        "dec_b": jnp.zeros((HID,), jnp.float32),
        "w_gen": s * jax.random.normal(ks[5], (2 * HID, 1), jnp.float32),
        "b_gen": jnp.zeros((1,), jnp.float32),
        "W_voc": s * jax.random.normal(ks[6], (2 * HID, VOC), jnp.float32),
        "b_voc": jnp.zeros((VOC,), jnp.float32),
        "w_agt": s * jax.random.normal(ks[7], (2 * HID, 1), jnp.float32),
        "b_agt": jnp.zeros((1,), jnp.float32),
    }


if __name__ == "__main__":
    SRC_LEN, TGT_LEN, BSZ, N_AGENTS = 16, 8, 2, 2

    key = jax.random.PRNGKey(0)
    k_art, k_prev, k_par = jax.random.split(key, 3)

    article = jax.random.randint(k_art, (SRC_LEN, BSZ, N_AGENTS), 0, EXT_VOC,
                                 dtype=jnp.int32)
    article_length = jnp.array([16, 12, 14, 10], dtype=jnp.int32)   # [BSZ*N_AGENTS]
    prev_input = jax.random.randint(k_prev, (TGT_LEN, BSZ), 0, VOC,
                                    dtype=jnp.int32)
    prev_input_length = jnp.array([8, 6], dtype=jnp.int32)

    params = init_params(k_par)

    fwd = jax.jit(multi_agents_summarizer)
    out = fwd(params, article, article_length, prev_input, prev_input_length)
    out = jax.block_until_ready(out)

    assert out.shape == (TGT_LEN, BSZ, EXT_VOC), out.shape

    # Pointer-generator mixture must remain (approximately) a probability
    # distribution; tolerance absorbs the bf16 MXU operands and the EUP
    # approximate reciprocals.
    sums = jnp.sum(out, axis=-1)
    assert jnp.allclose(sums, jnp.ones_like(sums), atol=2e-2), sums

    # Cross-check the fused kernel against the pure-JAX f32 reference.
    ref = jax.jit(multi_agents_summarizer_reference)(
        params, article, article_length, prev_input, prev_input_length)
    ref = jax.block_until_ready(ref)
    assert jnp.allclose(out, ref, atol=2e-2), float(jnp.max(jnp.abs(out - ref)))

    print("KERNEL_OK")
</pallas_src>

<mosaic_0001>
module attributes {stable_mosaic.version = 11 : i64} {
  func.func @_fused_pointer_gen_kernel(%arg0: i32, %arg1: memref<1x8x32xbf16, #tpu.memory_space<vmem>>, %arg2: memref<1x32x32xbf16, #tpu.memory_space<vmem>>, %arg3: memref<1x1x32xf32, #tpu.memory_space<vmem>>, %arg4: memref<1x64x128xbf16, #tpu.memory_space<vmem>>, %arg5: memref<32x34xbf16, #tpu.memory_space<vmem>>, %arg6: memref<32x34xbf16, #tpu.memory_space<vmem>>, %arg7: memref<1x34xf32, #tpu.memory_space<vmem>>, %arg8: memref<1x8x128xf32, #tpu.memory_space<vmem>>) attributes {dimension_semantics = [#tpu.dimension_semantics<parallel>], iteration_bounds = array<i64: 2>, scalar_prefetch = 0 : i64, scratch_operands = 0 : i64, tpu.core_type = #tpu.core_type<tc>, window_params = [{transform_indices = @transform_0, window_bounds = array<i64: 1, 8, 32>}, {transform_indices = @transform_1, window_bounds = array<i64: 1, 32, 32>}, {transform_indices = @transform_2, window_bounds = array<i64: 1, 1, 32>}, {transform_indices = @transform_3, window_bounds = array<i64: 1, 64, 128>}, {pipeline_mode = #tpu.pipeline_mode<synchronous>, transform_indices = @transform_4, window_bounds = array<i64: 32, 34>}, {pipeline_mode = #tpu.pipeline_mode<synchronous>, transform_indices = @transform_5, window_bounds = array<i64: 32, 34>}, {pipeline_mode = #tpu.pipeline_mode<synchronous>, transform_indices = @transform_6, window_bounds = array<i64: 1, 34>}, {transform_indices = @transform_7, window_bounds = array<i64: 1, 8, 128>}]} {
    %c0 = arith.constant 0 : index
    %c0_0 = arith.constant 0 : index
    %c0_1 = arith.constant 0 : index
    %0 = vector.load %arg1[%c0, %c0_0, %c0_1] : memref<1x8x32xbf16, #tpu.memory_space<vmem>>, vector<1x8x32xbf16>
    %c0_2 = arith.constant 0 : index
    %c0_3 = arith.constant 0 : index
    %c0_4 = arith.constant 0 : index
    %1 = vector.load %arg2[%c0_2, %c0_3, %c0_4] : memref<1x32x32xbf16, #tpu.memory_space<vmem>>, vector<1x32x32xbf16>
    %c0_5 = arith.constant 0 : index
    %c0_6 = arith.constant 0 : index
    %2 = vector.load %arg6[%c0_5, %c0_6] : memref<32x34xbf16, #tpu.memory_space<vmem>>, vector<32x34xbf16>
    %3 = vector.shape_cast %0 : vector<1x8x32xbf16> to vector<8x32xbf16>
    %c0_7 = arith.constant 0 : index
    %c0_8 = arith.constant 0 : index
    %4 = vector.load %arg5[%c0_7, %c0_8] : memref<32x34xbf16, #tpu.memory_space<vmem>>, vector<32x34xbf16>
    %cst = arith.constant dense<0.000000e+00> : vector<8x34xf32>
    %5 = tpu.matmul %3, %4, %cst {dimension_numbers = #tpu.dot_dimension_numbers<[1], [0], [0], [1], [0, 0, 1, 1], [], []>} : vector<8x32xbf16>, vector<32x34xbf16>, vector<8x34xf32> -> vector<8x34xf32>
    %c0_9 = arith.constant 0 : index
    %c0_10 = arith.constant 0 : index
    %6 = vector.load %arg7[%c0_9, %c0_10] : memref<1x34xf32, #tpu.memory_space<vmem>>, vector<1x34xf32>
    %7 = vector.broadcast %6 : vector<1x34xf32> to vector<8x34xf32>
    %8 = arith.addf %5, %7 : vector<8x34xf32>
    "tpu.trace_start"() <{level = 10 : i32, message = "btd,bkd->btk"}> : () -> ()
    %cst_11 = arith.constant dense<0.000000e+00> : vector<1x8x32xf32>
    %9 = tpu.matmul %0, %1, %cst_11 {dimension_numbers = #tpu.dot_dimension_numbers<[2], [2], [1], [1], [0, 0, 0, 1, 1, 1], [0], [0]>} : vector<1x8x32xbf16>, vector<1x32x32xbf16>, vector<1x8x32xf32> -> vector<1x8x32xf32>
    "tpu.trace_stop"() : () -> ()
    %c0_12 = arith.constant 0 : index
    %c0_13 = arith.constant 0 : index
    %c0_14 = arith.constant 0 : index
    %10 = vector.load %arg3[%c0_12, %c0_13, %c0_14] : memref<1x1x32xf32, #tpu.memory_space<vmem>>, vector<1x1x32xf32>
    %11 = vector.broadcast %10 : vector<1x1x32xf32> to vector<1x8x32xf32>
    %12 = arith.addf %9, %11 : vector<1x8x32xf32>
    %cst_15 = arith.constant dense<0xFF800000> : vector<1x8xf32>
    %13 = vector.multi_reduction <maximumf>, %12, %cst_15 [2] : vector<1x8x32xf32> to vector<1x8xf32>
    %14 = vector.shape_cast %13 : vector<1x8xf32> to vector<1x8x1xf32>
    %15 = vector.broadcast %14 : vector<1x8x1xf32> to vector<1x8x32xf32>
    %16 = arith.subf %12, %15 : vector<1x8x32xf32>
    %17 = math.exp %16 : vector<1x8x32xf32>
    %18 = tpu.iota {dimensions = array<i32: 1>} : vector<8x32xi32>
    %19 = vector.extract_strided_slice %17 {offsets = [0, 0, 0], sizes = [1, 8, 16], strides = [1, 1, 1]} : vector<1x8x32xf32> to vector<1x8x16xf32>
    %20 = vector.shape_cast %19 : vector<1x8x16xf32> to vector<8x16xf32>
    %cst_16 = arith.constant dense<0.000000e+00> : vector<8xf32>
    %21 = vector.multi_reduction <add>, %20, %cst_16 [1] : vector<8x16xf32> to vector<8xf32>
    %22 = vector.shape_cast %21 : vector<8xf32> to vector<8x1xf32>
    %cst_17 = arith.constant 9.99999968E-21 : f32
    %23 = vector.broadcast %cst_17 : f32 to vector<8x1xf32>
    %24 = arith.maximumf %22, %23 : vector<8x1xf32>
    %25 = tpu.reciprocal %24 {approx = true} : vector<8x1xf32> -> vector<8x1xf32>
    %26 = vector.broadcast %25 : vector<8x1xf32> to vector<8x16xf32>
    %27 = arith.mulf %20, %26 : vector<8x16xf32>
    %28 = vector.extract_strided_slice %1 {offsets = [0, 0, 0], sizes = [1, 16, 32], strides = [1, 1, 1]} : vector<1x32x32xbf16> to vector<1x16x32xbf16>
    %29 = vector.shape_cast %28 : vector<1x16x32xbf16> to vector<16x32xbf16>
    %30 = arith.truncf %27 : vector<8x16xf32> to vector<8x16xbf16>
    %cst_18 = arith.constant dense<0.000000e+00> : vector<8x32xf32>
    %31 = tpu.matmul %30, %29, %cst_18 {dimension_numbers = #tpu.dot_dimension_numbers<[1], [0], [0], [1], [0, 0, 1, 1], [], []>} : vector<8x16xbf16>, vector<16x32xbf16>, vector<8x32xf32> -> vector<8x32xf32>
    %32 = arith.truncf %31 : vector<8x32xf32> to vector<8x32xbf16>
    %cst_19 = arith.constant dense<0.000000e+00> : vector<8x34xf32>
    %33 = tpu.matmul %32, %2, %cst_19 {dimension_numbers = #tpu.dot_dimension_numbers<[1], [0], [0], [1], [0, 0, 1, 1], [], []>} : vector<8x32xbf16>, vector<32x34xbf16>, vector<8x34xf32> -> vector<8x34xf32>
    %34 = arith.addf %8, %33 : vector<8x34xf32>
    %35 = vector.extract_strided_slice %34 {offsets = [0, 0], sizes = [8, 32], strides = [1, 1]} : vector<8x34xf32> to vector<8x32xf32>
    %36 = vector.extract_strided_slice %34 {offsets = [0, 32], sizes = [8, 1], strides = [1, 1]} : vector<8x34xf32> to vector<8x1xf32>
    %37 = vector.extract_strided_slice %34 {offsets = [0, 33], sizes = [8, 1], strides = [1, 1]} : vector<8x34xf32> to vector<8x1xf32>
    %cst_20 = arith.constant 0.000000e+00 : f32
    %38 = vector.broadcast %cst_20 : f32 to vector<8x1xf32>
    %39 = arith.subf %38, %36 : vector<8x1xf32>
    %40 = math.exp %39 : vector<8x1xf32>
    %cst_21 = arith.constant 1.000000e+00 : f32
    %41 = vector.broadcast %cst_21 : f32 to vector<8x1xf32>
    %42 = arith.addf %41, %40 : vector<8x1xf32>
    %43 = tpu.reciprocal %42 {approx = true} : vector<8x1xf32> -> vector<8x1xf32>
    %cst_22 = arith.constant dense<0xFF800000> : vector<8xf32>
    %44 = vector.multi_reduction <maximumf>, %35, %cst_22 [1] : vector<8x32xf32> to vector<8xf32>
    %45 = vector.shape_cast %44 : vector<8xf32> to vector<8x1xf32>
    %46 = vector.broadcast %45 : vector<8x1xf32> to vector<8x32xf32>
    %47 = arith.subf %35, %46 : vector<8x32xf32>
    %48 = math.exp %47 : vector<8x32xf32>
    %cst_23 = arith.constant dense<0.000000e+00> : vector<8xf32>
    %49 = vector.multi_reduction <add>, %48, %cst_23 [1] : vector<8x32xf32> to vector<8xf32>
    %50 = vector.shape_cast %49 : vector<8xf32> to vector<8x1xf32>
    %51 = tpu.reciprocal %50 {approx = true} : vector<8x1xf32> -> vector<8x1xf32>
    %52 = vector.broadcast %51 : vector<8x1xf32> to vector<8x32xf32>
    %53 = arith.mulf %48, %52 : vector<8x32xf32>
    %54 = vector.broadcast %43 : vector<8x1xf32> to vector<8x32xf32>
    %55 = arith.mulf %54, %53 : vector<8x32xf32>
    %56 = vector.extract_strided_slice %17 {offsets = [0, 0, 16], sizes = [1, 8, 16], strides = [1, 1, 1]} : vector<1x8x32xf32> to vector<1x8x16xf32>
    %57 = vector.shape_cast %56 : vector<1x8x16xf32> to vector<8x16xf32>
    %cst_24 = arith.constant dense<0.000000e+00> : vector<8xf32>
    %58 = vector.multi_reduction <add>, %57, %cst_24 [1] : vector<8x16xf32> to vector<8xf32>
    %59 = vector.shape_cast %58 : vector<8xf32> to vector<8x1xf32>
    %cst_25 = arith.constant 9.99999968E-21 : f32
    %60 = vector.broadcast %cst_25 : f32 to vector<8x1xf32>
    %61 = arith.maximumf %59, %60 : vector<8x1xf32>
    %62 = tpu.reciprocal %61 {approx = true} : vector<8x1xf32> -> vector<8x1xf32>
    %63 = vector.broadcast %62 : vector<8x1xf32> to vector<8x16xf32>
    %64 = arith.mulf %57, %63 : vector<8x16xf32>
    %65 = vector.extract_strided_slice %1 {offsets = [0, 16, 0], sizes = [1, 16, 32], strides = [1, 1, 1]} : vector<1x32x32xbf16> to vector<1x16x32xbf16>
    %66 = vector.shape_cast %65 : vector<1x16x32xbf16> to vector<16x32xbf16>
    %67 = arith.truncf %64 : vector<8x16xf32> to vector<8x16xbf16>
    %cst_26 = arith.constant dense<0.000000e+00> : vector<8x32xf32>
    %68 = tpu.matmul %67, %66, %cst_26 {dimension_numbers = #tpu.dot_dimension_numbers<[1], [0], [0], [1], [0, 0, 1, 1], [], []>} : vector<8x16xbf16>, vector<16x32xbf16>, vector<8x32xf32> -> vector<8x32xf32>
    %69 = arith.truncf %68 : vector<8x32xf32> to vector<8x32xbf16>
    %cst_27 = arith.constant dense<0.000000e+00> : vector<8x34xf32>
    %70 = tpu.matmul %69, %2, %cst_27 {dimension_numbers = #tpu.dot_dimension_numbers<[1], [0], [0], [1], [0, 0, 1, 1], [], []>} : vector<8x32xbf16>, vector<32x34xbf16>, vector<8x34xf32> -> vector<8x34xf32>
    %71 = arith.addf %8, %70 : vector<8x34xf32>
    %72 = vector.extract_strided_slice %71 {offsets = [0, 0], sizes = [8, 32], strides = [1, 1]} : vector<8x34xf32> to vector<8x32xf32>
    %73 = vector.extract_strided_slice %71 {offsets = [0, 32], sizes = [8, 1], strides = [1, 1]} : vector<8x34xf32> to vector<8x1xf32>
    %74 = vector.extract_strided_slice %71 {offsets = [0, 33], sizes = [8, 1], strides = [1, 1]} : vector<8x34xf32> to vector<8x1xf32>
    %cst_28 = arith.constant 0.000000e+00 : f32
    %75 = vector.broadcast %cst_28 : f32 to vector<8x1xf32>
    %76 = arith.subf %75, %73 : vector<8x1xf32>
    %77 = math.exp %76 : vector<8x1xf32>
    %cst_29 = arith.constant 1.000000e+00 : f32
    %78 = vector.broadcast %cst_29 : f32 to vector<8x1xf32>
    %79 = arith.addf %78, %77 : vector<8x1xf32>
    %80 = tpu.reciprocal %79 {approx = true} : vector<8x1xf32> -> vector<8x1xf32>
    %cst_30 = arith.constant dense<0xFF800000> : vector<8xf32>
    %81 = vector.multi_reduction <maximumf>, %72, %cst_30 [1] : vector<8x32xf32> to vector<8xf32>
    %82 = vector.shape_cast %81 : vector<8xf32> to vector<8x1xf32>
    %83 = vector.broadcast %82 : vector<8x1xf32> to vector<8x32xf32>
    %84 = arith.subf %72, %83 : vector<8x32xf32>
    %85 = math.exp %84 : vector<8x32xf32>
    %cst_31 = arith.constant dense<0.000000e+00> : vector<8xf32>
    %86 = vector.multi_reduction <add>, %85, %cst_31 [1] : vector<8x32xf32> to vector<8xf32>
    %87 = vector.shape_cast %86 : vector<8xf32> to vector<8x1xf32>
    %88 = tpu.reciprocal %87 {approx = true} : vector<8x1xf32> -> vector<8x1xf32>
    %89 = vector.broadcast %88 : vector<8x1xf32> to vector<8x32xf32>
    %90 = arith.mulf %85, %89 : vector<8x32xf32>
    %91 = vector.broadcast %80 : vector<8x1xf32> to vector<8x32xf32>
    %92 = arith.mulf %91, %90 : vector<8x32xf32>
    %93 = arith.maximumf %37, %74 : vector<8x1xf32>
    %94 = arith.subf %37, %93 : vector<8x1xf32>
    %95 = math.exp %94 : vector<8x1xf32>
    %96 = arith.subf %74, %93 : vector<8x1xf32>
    %97 = math.exp %96 : vector<8x1xf32>
    %98 = arith.addf %95, %97 : vector<8x1xf32>
    %99 = tpu.reciprocal %98 : vector<8x1xf32> -> vector<8x1xf32>
    %100 = arith.mulf %95, %99 : vector<8x1xf32>
    %101 = vector.broadcast %100 : vector<8x1xf32> to vector<8x32xf32>
    %102 = arith.mulf %101, %55 : vector<8x32xf32>
    %103 = arith.mulf %95, %99 : vector<8x1xf32>
    %cst_32 = arith.constant 1.000000e+00 : f32
    %104 = vector.broadcast %cst_32 : f32 to vector<8x1xf32>
    %105 = arith.subf %104, %43 : vector<8x1xf32>
    %106 = arith.mulf %103, %105 : vector<8x1xf32>
    %107 = arith.mulf %106, %25 : vector<8x1xf32>
    %108 = arith.mulf %97, %99 : vector<8x1xf32>
    %109 = vector.broadcast %108 : vector<8x1xf32> to vector<8x32xf32>
    %110 = arith.mulf %109, %92 : vector<8x32xf32>
    %111 = arith.addf %102, %110 : vector<8x32xf32>
    %cst_33 = arith.constant 1.000000e+00 : f32
    %112 = vector.broadcast %cst_33 : f32 to vector<8x1xf32>
    %113 = arith.subf %112, %80 : vector<8x1xf32>
    %114 = arith.mulf %108, %113 : vector<8x1xf32>
    %115 = arith.mulf %114, %62 : vector<8x1xf32>
    %c16_i32 = arith.constant 16 : i32
    %116 = vector.broadcast %c16_i32 : i32 to vector<8x32xi32>
    %117 = arith.cmpi slt, %18, %116 : vector<8x32xi32>
    %118 = vector.shape_cast %107 : vector<8x1xf32> to vector<8x1xf32>
    %119 = vector.broadcast %118 : vector<8x1xf32> to vector<8x32xf32>
    %120 = vector.shape_cast %115 : vector<8x1xf32> to vector<8x1xf32>
    %121 = vector.broadcast %120 : vector<8x1xf32> to vector<8x32xf32>
    %122 = arith.select %117, %119, %121 : vector<8x32xi1>, vector<8x32xf32>
    %123 = vector.shape_cast %17 : vector<1x8x32xf32> to vector<8x32xf32>
    %124 = arith.mulf %123, %122 : vector<8x32xf32>
    %c0_34 = arith.constant 0 : index
    %c0_35 = arith.constant 0 : index
    %c0_36 = arith.constant 0 : index
    %125 = vector.load %arg4[%c0_34, %c0_35, %c0_36] : memref<1x64x128xbf16, #tpu.memory_space<vmem>>, vector<1x64x128xbf16>
    %126 = vector.shape_cast %125 : vector<1x64x128xbf16> to vector<64x128xbf16>
    %127 = arith.truncf %124 : vector<8x32xf32> to vector<8x32xbf16>
    %128 = vector.extract_strided_slice %126 {offsets = [0, 0], sizes = [32, 128], strides = [1, 1]} : vector<64x128xbf16> to vector<32x128xbf16>
    %cst_37 = arith.constant dense<0.000000e+00> : vector<8x128xf32>
    %129 = tpu.matmul %127, %128, %cst_37 {dimension_numbers = #tpu.dot_dimension_numbers<[1], [0], [0], [1], [0, 0, 1, 1], [], []>} : vector<8x32xbf16>, vector<32x128xbf16>, vector<8x128xf32> -> vector<8x128xf32>
    %130 = arith.truncf %111 : vector<8x32xf32> to vector<8x32xbf16>
    %131 = vector.extract_strided_slice %126 {offsets = [32, 0], sizes = [32, 128], strides = [1, 1]} : vector<64x128xbf16> to vector<32x128xbf16>
    %cst_38 = arith.constant dense<0.000000e+00> : vector<8x128xf32>
    %132 = tpu.matmul %130, %131, %cst_38 {dimension_numbers = #tpu.dot_dimension_numbers<[1], [0], [0], [1], [0, 0, 1, 1], [], []>} : vector<8x32xbf16>, vector<32x128xbf16>, vector<8x128xf32> -> vector<8x128xf32>
    %133 = arith.addf %129, %132 : vector<8x128xf32>
    %c0_39 = arith.constant 0 : index
    %c0_40 = arith.constant 0 : index
    %c0_41 = arith.constant 0 : index
    %134 = vector.load %arg8[%c0_39, %c0_40, %c0_41] : memref<1x8x128xf32, #tpu.memory_space<vmem>>, vector<1x8x128xf32>
    %135 = vector.shape_cast %134 : vector<1x8x128xf32> to vector<8x128xf32>
    %136 = vector.shape_cast %133 : vector<8x128xf32> to vector<1x8x128xf32>
    tpu.vector_store %arg8[%c0_39, %c0_40, %c0_41], %136 {strides = array<i32>} : memref<1x8x128xf32, #tpu.memory_space<vmem>>, vector<1x8x128xf32>,
    return
  }
  func.func @transform_0(%arg0: i32) -> (i32, i32, i32) {
    %c0_i32 = arith.constant 0 : i32
    %c0_i32_0 = arith.constant 0 : i32
    %c0_i32_1 = arith.constant 0 : i32
    return %arg0, %c0_i32, %c0_i32_0 : i32, i32, i32
  }
  func.func @transform_1(%arg0: i32) -> (i32, i32, i32) {
    %c0_i32 = arith.constant 0 : i32
    %c0_i32_0 = arith.constant 0 : i32
    %c0_i32_1 = arith.constant 0 : i32
    return %arg0, %c0_i32, %c0_i32_0 : i32, i32, i32
  }
  func.func @transform_2(%arg0: i32) -> (i32, i32, i32) {
    %c0_i32 = arith.constant 0 : i32
    %c0_i32_0 = arith.constant 0 : i32
    %c0_i32_1 = arith.constant 0 : i32
    return %arg0, %c0_i32, %c0_i32_0 : i32, i32, i32
  }
  func.func @transform_3(%arg0: i32) -> (i32, i32, i32) {
    %c0_i32 = arith.constant 0 : i32
    %c0_i32_0 = arith.constant 0 : i32
    %c0_i32_1 = arith.constant 0 : i32
    return %arg0, %c0_i32, %c0_i32_0 : i32, i32, i32
  }
  func.func @transform_4(%arg0: i32) -> (i32, i32) {
    %c0_i32 = arith.constant 0 : i32
    %c0_i32_0 = arith.constant 0 : i32
    %c0_i32_1 = arith.constant 0 : i32
    return %c0_i32, %c0_i32_0 : i32, i32
  }
  func.func @transform_5(%arg0: i32) -> (i32, i32) {
    %c0_i32 = arith.constant 0 : i32
    %c0_i32_0 = arith.constant 0 : i32
    %c0_i32_1 = arith.constant 0 : i32
    return %c0_i32, %c0_i32_0 : i32, i32
  }
  func.func @transform_6(%arg0: i32) -> (i32, i32) {
    %c0_i32 = arith.constant 0 : i32
    %c0_i32_0 = arith.constant 0 : i32
    %c0_i32_1 = arith.constant 0 : i32
    return %c0_i32, %c0_i32_0 : i32, i32
  }
  func.func @transform_7(%arg0: i32) -> (i32, i32, i32) {
    %c0_i32 = arith.constant 0 : i32
    %c0_i32_0 = arith.constant 0 : i32
    %c0_i32_1 = arith.constant 0 : i32
    return %arg0, %c0_i32, %c0_i32_0 : i32, i32, i32
  }
}

</mosaic_0001>

<llo_original>
// kernel: custom-call.6
$region0: #{custom-call.6}
  %s0 = inlined_call_operand.vmem [shape: bf16[16,4,32], index: 0, kind: output, shape index: {}]

// kernel: custom-call
$region0: #{custom-call}
  %s0 = inlined_call_operand.vmem [shape: f32[4,32], index: 0, kind: output, shape index: {}]

// kernel: custom-call.5
$region0: #{custom-call.5}
  %s0 = inlined_call_operand.vmem [shape: bf16[8,2,32], index: 0, kind: output, shape index: {}]

// kernel: eq.1
$region0: #{eq.1}
  %s0 = inlined_call_operand.vmem [shape: s32[2,2,16], index: 0, kind: input, shape index: {}]
  %s1 = inlined_call_operand.vmem [shape: s32[2,32], index: 1, kind: output, shape index: {}]
  $region1: #{eq.1} parent=0
    #allocation0 [shape = 'u8[4096]{0}', space=vmem, size = 0x1000, scoped, tag = 'scoped mem for output reshape']
    #allocation1 [shape = 'u8[8192]{0}', space=vmem, size = 0x2000, scoped, tag = 'scoped mem for input reshape']
    %s3 = sshllo.u32 0, 2
    %s4 = scalar_lea.vmem %s0, 2
    %v5 = vld [vmem:[%s4] sm:%s3]
    %s6 = scalar_lea.vmem [#allocation1], 8
    %7 = vst [vmem:[%s6] sm:%s3] %v5
    %v8 = vld [vmem:[%s0] sm:%s3]
    %9 = vst [vmem:[#allocation1] sm:%s3] %v8
    %s10 = smov 3
    %v11 = vld [vmem:[#allocation1] ss:$8 sm:%s10]
    %vm12 = vcmask 130048
    %13 = vst.msk [vmem:[#allocation0] sm:$0x3] %vm12, %v11
    %s14 = scalar_lea.vmem [#allocation1], 1
    %s15 = smov 3
    %v16 = vld [vmem:[%s14] ss:$8 sm:%s15]
    %17 = vrot.lane.b32.xlu0 %v16, 16
    %v18 = vpop.permute.xlu0 %17
    %vm19 = vcmask 261248
    %20 = vst.msk [vmem:[#allocation0] sm:$0x3] %vm19, %v18
    %s22 = sshllo.u32 0, 2
    %v24 = vld [vmem:[#allocation0] sm:%s22]
    %s25 = sshllo.u32 0, 2
    %26 = vst [vmem:[%s1] sm:%s25] %v24

// kernel: lt.29
$region0: #{lt.29}
  %s0 = inlined_call_operand.vmem [shape: s32[4], index: 0, kind: input, shape index: {}]
  %s1 = inlined_call_operand.vmem [shape: s32[2,2], index: 1, kind: output, shape index: {}]
  $region1: #{lt.29} parent=0
    #allocation0 [shape = 'u8[4096]{0}', space=vmem, size = 0x1000, scoped, tag = 'scoped mem for output reshape']
    #allocation1 [shape = 'u8[4096]{0}', space=vmem, size = 0x1000, scoped, tag = 'scoped mem for input reshape']
    %s3 = sshllo.u32 0, 1
    %v4 = vld [vmem:[%s0] sm:%s3]
    %5 = vst [vmem:[#allocation1] sm:%s3] %v4
    %v6 = vld [vmem:[#allocation1] sm:$0x1]
    %vm7 = vcmask 15360
    %8 = vst.msk [vmem:[#allocation0] sm:$0x1] %vm7, %v6
    %v9 = vld [vmem:[#allocation1] sm:$0x1]
    %10 = vrot.lane.b32.xlu0 %v9, 126
    %v11 = vpop.permute.xlu0 %10
    %vm12 = vcmask 15360
    %s13 = scalar_lea.vmem [#allocation0], 1
    %14 = vst.msk [vmem:[%s13] sm:$0x1] %vm12, %v11
    %s16 = sshllo.u32 0, 2
    %v18 = vld [vmem:[#allocation0] sm:%s16]
    %s19 = sshllo.u32 0, 2
    %20 = vst [vmem:[%s1] sm:%s19] %v18

// kernel: multi_agents_summarizer.1
$region0: #{multi_agents_summarizer.1}
  #allocation0 [shape = 'u32[]', space=smem, size = 0x4, offset = 0x4, fixed_abs, tag = 'smem constant byte address 0x4 - core index']
  #allocation1 [shape = 'u32[144,128]{1,0:T(1,128)}', space=vmem, size = 0x12000, scoped, tag = 'internal scratch']
  %s0 = inlined_call_operand.vmem [shape: bf16[2,8,32], index: 0, kind: input, shape index: {}]
  %s1 = inlined_call_operand.vmem [shape: bf16[2,32,32], index: 1, kind: input, shape index: {}]
  %s2 = inlined_call_operand.vmem [shape: f32[2,1,32], index: 2, kind: input, shape index: {}]
  %s3 = inlined_call_operand.vmem [shape: bf16[2,64,128], index: 3, kind: input, shape index: {}]
  %s4 = inlined_call_operand.vmem [shape: bf16[32,34], index: 4, kind: input, shape index: {}]
  %s5 = inlined_call_operand.vmem [shape: bf16[32,34], index: 5, kind: input, shape index: {}]
  %s6 = inlined_call_operand.vmem [shape: f32[1,34], index: 6, kind: input, shape index: {}]
  %s7 = inlined_call_operand.vmem [shape: f32[2,8,128], index: 7, kind: output, shape index: {}]
  %s8 = sld [smem:[#allocation0]]
  $region61: #{multi_agents_summarizer.1} parent=0
    _
  %s10 = ssub.s32 1, %s8
  %s11 = scalar_select 0, %s10, %s8
  loop: start=0, step=1, limit=4
  $region2: #{multi_agents_summarizer.1} parent=0 // loop_pre_header
    _
  $region3: #{multi_agents_summarizer.1} parent=0 // loop_header
    %s13 = sphi 0, %s17
    %p14 = scmp.ge.s32.totalorder %s13, 4
    %s23 = sphi 0, %s25
    %s26 = sphi 0, %s23
    %s27 = sphi 0, %s26
    %s43 = sphi 0, %s27
    %s49 = sphi 0, %s51
    %s52 = sphi 0, %s49
    %s53 = sphi 0, %s52
    %s69 = sphi 0, %s53
    %s75 = sphi 0, %s77
    %s78 = sphi 0, %s75
    %s79 = sphi 0, %s78
    %s95 = sphi 0, %s79
    %s101 = sphi 0, %s103
    %s104 = sphi 0, %s101
    %s105 = sphi 0, %s104
    %s121 = sphi 0, %s105
    %s125 = sphi 0, %s125
    %s127 = sphi 0, %s125
    %s128 = sphi 0, %s127
    %s142 = sphi 0, %s128
    %s146 = sphi 0, %s146
    %s148 = sphi 0, %s146
    %s149 = sphi 0, %s148
    %s163 = sphi 0, %s149
    %s167 = sphi 0, %s167
    %s169 = sphi 0, %s167
    %s170 = sphi 0, %s169
    %s184 = sphi 0, %s170
    %s190 = sphi 0, %s192
    %s193 = sphi 0, %s190
    %s194 = sphi 0, %s193
    %s210 = sphi 0, %s194
  $region4: #{multi_agents_summarizer.1} parent=0 // loop_header_branch
    %16 = sbr.rel (%p14) target = $region8
  $region5: #{multi_agents_summarizer.1} parent=0 // loop_body
    %s18 = ssub.s32 %s13, 1
    %s19 = ssub.s32 %s13, 2
    %s20 = sadd.s32 %s13, 1
    %s21 = ssub.s32 %s13, %s20
    %p22 = scmp.eq.s32.totalorder %s21, 0
    %s24 = sadd.s32 %s23, 1
    %s25 = scalar_select %p22, %s23, %s24
    %p28 = pneg %p22
    %p29 = scmp.eq.s32.totalorder %s13, 1
    %p30 = por %p28, %p29
    %p31 = scmp.ne.s32.totalorder %s23, %s26
    %p32 = scmp.eq.s32.totalorder %s13, 0
    %p33 = por %p31, %p32
    %p34 = scmp.ne.s32.totalorder %s23, %s26
    %p35 = scmp.eq.s32.totalorder %s18, 1
    %p36 = por %p34, %p35
    %p37 = scmp.ne.s32.totalorder %s26, %s27
    %p38 = scmp.eq.s32.totalorder %s18, 0
    %p39 = por %p37, %p38
    %p40 = scmp.ne.s32.totalorder %s26, %s27
    %p41 = scmp.eq.s32.totalorder %s19, 1
    %p42 = por %p40, %p41
    %p44 = scmp.ne.s32.totalorder %s27, %s43
    %p45 = scmp.eq.s32.totalorder %s19, 0
    %p46 = por %p44, %p45
    %s47 = ssub.s32 %s13, %s20
    %p48 = scmp.eq.s32.totalorder %s47, 0
    %s50 = sadd.s32 %s49, 1
    %s51 = scalar_select %p48, %s49, %s50
    %p54 = pneg %p48
    %p55 = scmp.eq.s32.totalorder %s13, 1
    %p56 = por %p54, %p55
    %p57 = scmp.ne.s32.totalorder %s49, %s52
    %p58 = scmp.eq.s32.totalorder %s13, 0
    %p59 = por %p57, %p58
    %p60 = scmp.ne.s32.totalorder %s49, %s52
    %p61 = scmp.eq.s32.totalorder %s18, 1
    %p62 = por %p60, %p61
    %p63 = scmp.ne.s32.totalorder %s52, %s53
    %p64 = scmp.eq.s32.totalorder %s18, 0
    %p65 = por %p63, %p64
    %p66 = scmp.ne.s32.totalorder %s52, %s53
    %p67 = scmp.eq.s32.totalorder %s19, 1
    %p68 = por %p66, %p67
    %p70 = scmp.ne.s32.totalorder %s53, %s69
    %p71 = scmp.eq.s32.totalorder %s19, 0
    %p72 = por %p70, %p71
    %s73 = ssub.s32 %s13, %s20
    %p74 = scmp.eq.s32.totalorder %s73, 0
    %s76 = sadd.s32 %s75, 1
    %s77 = scalar_select %p74, %s75, %s76
    %p80 = pneg %p74
    %p81 = scmp.eq.s32.totalorder %s13, 1
    %p82 = por %p80, %p81
    %p83 = scmp.ne.s32.totalorder %s75, %s78
    %p84 = scmp.eq.s32.totalorder %s13, 0
    %p85 = por %p83, %p84
    %p86 = scmp.ne.s32.totalorder %s75, %s78
    %p87 = scmp.eq.s32.totalorder %s18, 1
    %p88 = por %p86, %p87
    %p89 = scmp.ne.s32.totalorder %s78, %s79
    %p90 = scmp.eq.s32.totalorder %s18, 0
    %p91 = por %p89, %p90
    %p92 = scmp.ne.s32.totalorder %s78, %s79
    %p93 = scmp.eq.s32.totalorder %s19, 1
    %p94 = por %p92, %p93
    %p96 = scmp.ne.s32.totalorder %s79, %s95
    %p97 = scmp.eq.s32.totalorder %s19, 0
    %p98 = por %p96, %p97
    %s99 = ssub.s32 %s13, %s20
    %p100 = scmp.eq.s32.totalorder %s99, 0
    %s102 = sadd.s32 %s101, 1
    %s103 = scalar_select %p100, %s101, %s102
    %p106 = pneg %p100
    %p107 = scmp.eq.s32.totalorder %s13, 1
    %p108 = por %p106, %p107
    %p109 = scmp.ne.s32.totalorder %s101, %s104
    %p110 = scmp.eq.s32.totalorder %s13, 0
    %p111 = por %p109, %p110
    %p112 = scmp.ne.s32.totalorder %s101, %s104
    %p113 = scmp.eq.s32.totalorder %s18, 1
    %p114 = por %p112, %p113
    %p115 = scmp.ne.s32.totalorder %s104, %s105
    %p116 = scmp.eq.s32.totalorder %s18, 0
    %p117 = por %p115, %p116
    %p118 = scmp.ne.s32.totalorder %s104, %s105
    %p119 = scmp.eq.s32.totalorder %s19, 1
    %p120 = por %p118, %p119
    %p122 = scmp.ne.s32.totalorder %s105, %s121
    %p123 = scmp.eq.s32.totalorder %s19, 0
    %p124 = por %p122, %p123
    %s126 = sadd.s32 %s125, 1
    %p129 = scmp.eq.s32.totalorder %s13, 1
    %p130 = scmp.ne.s32.totalorder %s125, %s127
    %p131 = scmp.eq.s32.totalorder %s13, 0
    %p132 = por %p130, %p131
    %p133 = scmp.ne.s32.totalorder %s125, %s127
    %p134 = scmp.eq.s32.totalorder %s18, 1
    %p135 = por %p133, %p134
    %p136 = scmp.ne.s32.totalorder %s127, %s128
    %p137 = scmp.eq.s32.totalorder %s18, 0
    %p138 = por %p136, %p137
    %p139 = scmp.ne.s32.totalorder %s127, %s128
    %p140 = scmp.eq.s32.totalorder %s19, 1
    %p141 = por %p139, %p140
    %p143 = scmp.ne.s32.totalorder %s128, %s142
    %p144 = scmp.eq.s32.totalorder %s19, 0
    %p145 = por %p143, %p144
    %s147 = sadd.s32 %s146, 1
    %p150 = scmp.eq.s32.totalorder %s13, 1
    %p151 = scmp.ne.s32.totalorder %s146, %s148
    %p152 = scmp.eq.s32.totalorder %s13, 0
    %p153 = por %p151, %p152
    %p154 = scmp.ne.s32.totalorder %s146, %s148
    %p155 = scmp.eq.s32.totalorder %s18, 1
    %p156 = por %p154, %p155
    %p157 = scmp.ne.s32.totalorder %s148, %s149
    %p158 = scmp.eq.s32.totalorder %s18, 0
    %p159 = por %p157, %p158
    %p160 = scmp.ne.s32.totalorder %s148, %s149
    %p161 = scmp.eq.s32.totalorder %s19, 1
    %p162 = por %p160, %p161
    %p164 = scmp.ne.s32.totalorder %s149, %s163
    %p165 = scmp.eq.s32.totalorder %s19, 0
    %p166 = por %p164, %p165
    %s168 = sadd.s32 %s167, 1
    %p171 = scmp.eq.s32.totalorder %s13, 1
    %p172 = scmp.ne.s32.totalorder %s167, %s169
    %p173 = scmp.eq.s32.totalorder %s13, 0
    %p174 = por %p172, %p173
    %p175 = scmp.ne.s32.totalorder %s167, %s169
    %p176 = scmp.eq.s32.totalorder %s18, 1
    %p177 = por %p175, %p176
    %p178 = scmp.ne.s32.totalorder %s169, %s170
    %p179 = scmp.eq.s32.totalorder %s18, 0
    %p180 = por %p178, %p179
    %p181 = scmp.ne.s32.totalorder %s169, %s170
    %p182 = scmp.eq.s32.totalorder %s19, 1
    %p183 = por %p181, %p182
    %p185 = scmp.ne.s32.totalorder %s170, %s184
    %p186 = scmp.eq.s32.totalorder %s19, 0
    %p187 = por %p185, %p186
    %s188 = ssub.s32 %s13, %s20
    %p189 = scmp.eq.s32.totalorder %s188, 0
    %s191 = sadd.s32 %s190, 1
    %s192 = scalar_select %p189, %s190, %s191
    %p195 = pneg %p189
    %p196 = scmp.eq.s32.totalorder %s13, 1
    %p197 = por %p195, %p196
    %p198 = scmp.ne.s32.totalorder %s190, %s193
    %p199 = scmp.eq.s32.totalorder %s13, 0
    %p200 = por %p198, %p199
    %p201 = scmp.ne.s32.totalorder %s190, %s193
    %p202 = scmp.eq.s32.totalorder %s18, 1
    %p203 = por %p201, %p202
    %p204 = scmp.ne.s32.totalorder %s193, %s194
    %p205 = scmp.eq.s32.totalorder %s18, 0
    %p206 = por %p204, %p205
    %p207 = scmp.ne.s32.totalorder %s193, %s194
    %p208 = scmp.eq.s32.totalorder %s19, 1
    %p209 = por %p207, %p208
    %p211 = scmp.ne.s32.totalorder %s194, %s210
    %p212 = scmp.eq.s32.totalorder %s19, 0
    %p213 = por %p211, %p212
    %p214 = scmp.le.s32.totalorder 1, %s13
    %p215 = scmp.lt.s32.totalorder %s13, 3
    %p216 = pnand %p214, %p215
    %p217 = pneg %p216
    // Predicated region
    $region9: #{multi_agents_summarizer.1} parent=5 // pred_check
      _
    $region10: #{multi_agents_summarizer.1} parent=5 // pred_check_branch
      %219 = sbr.rel (%p216) target = $region12
    $region11: #{multi_agents_summarizer.1} parent=5 // pred_region
      %s220 = ssub.s32 %s13, 1
      // Predicated region
      $region13: #{multi_agents_summarizer.1} parent=11 // pred_check
        %p221 = pneg %p138
      $region14: #{multi_agents_summarizer.1} parent=11 // pred_check_branch
        %223 = sbr.rel (%p221) target = $region16
      $region15: #{multi_agents_summarizer.1} parent=11 // pred_region
        _
      $region16: #{multi_agents_summarizer.1} parent=11 // pred_fallthru
        _
      // Predicated region
      $region17: #{multi_agents_summarizer.1} parent=11 // pred_check
        %p224 = pneg %p159
      $region18: #{multi_agents_summarizer.1} parent=11 // pred_check_branch
        %226 = sbr.rel (%p224) target = $region20
      $region19: #{multi_agents_summarizer.1} parent=11 // pred_region
        _
      $region20: #{multi_agents_summarizer.1} parent=11 // pred_fallthru
        _
      // Predicated region
      $region21: #{multi_agents_summarizer.1} parent=11 // pred_check
        %p227 = pneg %p180
      $region22: #{multi_agents_summarizer.1} parent=11 // pred_check_branch
        %229 = sbr.rel (%p227) target = $region24
      $region23: #{multi_agents_summarizer.1} parent=11 // pred_region
        _
      $region24: #{multi_agents_summarizer.1} parent=11 // pred_fallthru
        _
    $region12: #{multi_agents_summarizer.1} parent=5 // pred_fallthru
      _
    %p230 = scmp.lt.s32.totalorder %s13, 2
    // Predicated region
    $region25: #{multi_agents_summarizer.1} parent=5 // pred_check
      %p231 = pneg %p230
    $region26: #{multi_agents_summarizer.1} parent=5 // pred_check_branch
      %233 = sbr.rel (%p231) target = $region28
    $region27: #{multi_agents_summarizer.1} parent=5 // pred_region
      // Predicated region
      $region29: #{multi_agents_summarizer.1} parent=27 // pred_check
        %p234 = pneg %p33
      $region30: #{multi_agents_summarizer.1} parent=27 // pred_check_branch
        %236 = sbr.rel (%p234) target = $region32
      $region31: #{multi_agents_summarizer.1} parent=27 // pred_region
        %p237 = scmp.lt.s32.totalorder %s13, 1
        %s238 = scalar_select %p237, %s13, 1
        %s239 = smul.addr %s238, 4
        %s240 = scalar_lea.vmem %s0, %s239
      $region32: #{multi_agents_summarizer.1} parent=27 // pred_fallthru
        _
      // Predicated region
      $region33: #{multi_agents_summarizer.1} parent=27 // pred_check
        %p241 = pneg %p59
      $region34: #{multi_agents_summarizer.1} parent=27 // pred_check_branch
        %243 = sbr.rel (%p241) target = $region36
      $region35: #{multi_agents_summarizer.1} parent=27 // pred_region
        %p244 = scmp.lt.s32.totalorder %s13, 1
        %s245 = scalar_select %p244, %s13, 1
        %s246 = smul.addr %s245, 4
        %s247 = smul.addr %s246, 4
        %s248 = scalar_lea.vmem %s1, %s247
      $region36: #{multi_agents_summarizer.1} parent=27 // pred_fallthru
        _
      // Predicated region
      $region37: #{multi_agents_summarizer.1} parent=27 // pred_check
        %p249 = pneg %p85
      $region38: #{multi_agents_summarizer.1} parent=27 // pred_check_branch
        %251 = sbr.rel (%p249) target = $region40
      $region39: #{multi_agents_summarizer.1} parent=27 // pred_region
        %p252 = scmp.lt.s32.totalorder %s13, 1
        %s253 = scalar_select %p252, %s13, 1
        %s254 = scalar_lea.vmem %s2, %s253
      $region40: #{multi_agents_summarizer.1} parent=27 // pred_fallthru
        _
      // Predicated region
      $region41: #{multi_agents_summarizer.1} parent=27 // pred_check
        %p255 = pneg %p111
      $region42: #{multi_agents_summarizer.1} parent=27 // pred_check_branch
        %257 = sbr.rel (%p255) target = $region44
      $region43: #{multi_agents_summarizer.1} parent=27 // pred_region
        %p258 = scmp.lt.s32.totalorder %s13, 1
        %s259 = scalar_select %p258, %s13, 1
        %s260 = smul.addr %s259, 8
        %s261 = smul.addr %s260, 4
        %s262 = scalar_lea.vmem %s3, %s261
      $region44: #{multi_agents_summarizer.1} parent=27 // pred_fallthru
        _
    $region28: #{multi_agents_summarizer.1} parent=5 // pred_fallthru
      _
    %p263 = scmp.le.s32.totalorder 1, %s13
    %p264 = scmp.lt.s32.totalorder %s13, 3
    %p265 = pnand %p263, %p264
    %p266 = pneg %p265
    // Predicated region
    $region45: #{multi_agents_summarizer.1} parent=5 // pred_check
      _
    $region46: #{multi_agents_summarizer.1} parent=5 // pred_check_branch
      %268 = sbr.rel (%p265) target = $region48
    $region47: #{multi_agents_summarizer.1} parent=5 // pred_region
      %s269 = ssub.s32 %s13, 1
      %p270 = scmp.lt.s32.totalorder %s18, 1
      %s271 = scalar_select %p270, %s18, 1
      %s272 = smul.addr %s271, 4
      %s273 = scalar_lea.vmem %s0, %s272
      %p274 = pneg %p39
      %p275 = pneg %p36
      %p276 = scmp.lt.s32.totalorder %s18, 1
      %s277 = scalar_select %p276, %s18, 1
      %s278 = smul.addr %s277, 4
      %s279 = smul.addr %s278, 4
      %s280 = scalar_lea.vmem %s1, %s279
      %p281 = pneg %p65
      %p282 = pneg %p62
      %p283 = scmp.lt.s32.totalorder %s18, 1
      %s284 = scalar_select %p283, %s18, 1
      %s285 = scalar_lea.vmem %s2, %s284
      %p286 = pneg %p91
      %p287 = pneg %p88
      %p288 = scmp.lt.s32.totalorder %s18, 1
      %s289 = scalar_select %p288, %s18, 1
      %s290 = smul.addr %s289, 8
      %s291 = smul.addr %s290, 4
      %s292 = scalar_lea.vmem %s3, %s291
      %p293 = pneg %p117
      %p294 = pneg %p114
      %p295 = pneg %p138
      %p296 = pneg %p135
      %p297 = pneg %p159
      %p298 = pneg %p156
      %p299 = pneg %p180
      %p300 = pneg %p177
      %p301 = pneg %p206
      %p302 = pneg %p203
      %p303 = scmp.lt.s32.totalorder %s18, 1
      %s304 = scalar_select %p303, %s18, 1
      %s305 = smul.addr %s304, 8
      %s306 = scalar_lea.vmem %s7, %s305
      %p307 = scmp.lt.s32.totalorder %s18, 1
      %s308 = scalar_select %p307, %s18, 1
      %s309 = smul.addr %s308, 4
      %s310 = scalar_lea.vmem %s0, %s309
      %p311 = scmp.lt.s32.totalorder %s18, 1
      %s312 = scalar_select %p311, %s18, 1
      %s313 = smul.addr %s312, 4
      %s314 = smul.addr %s313, 4
      %s315 = scalar_lea.vmem %s1, %s314
      %p316 = scmp.lt.s32.totalorder %s18, 1
      %s317 = scalar_select %p316, %s18, 1
      %s318 = scalar_lea.vmem %s2, %s317
      %p319 = scmp.lt.s32.totalorder %s18, 1
      %s320 = scalar_select %p319, %s18, 1
      %s321 = smul.addr %s320, 8
      %s322 = smul.addr %s321, 4
      %s323 = scalar_lea.vmem %s3, %s322
      %p324 = scmp.lt.s32.totalorder %s18, 1
      %s325 = scalar_select %p324, %s18, 1
      %s326 = smul.addr %s325, 8
      %s327 = scalar_lea.vmem %s7, %s326
      %v329 = vld [vmem:[%s310] sm:$0xf]
      %v330 = vld [vmem:[%s315] sm:$0xf]
      %v331 = vld [vmem:[%s315 + $0x4] sm:$0xf]
      %v332 = vld [vmem:[%s315 + $0x8] sm:$0xf]
      %v333 = vld [vmem:[%s315 + $0xc] sm:$0xf]
      %v334 = vld [vmem:[%s5] sm:$0xf]
      %v335 = vld [vmem:[%s5 + $0x4] sm:$0xf]
      %v336 = vld [vmem:[%s5 + $0x8] sm:$0xf]
      %v337 = vld [vmem:[%s5 + $0xc] sm:$0xf]
      %v338 = vld [vmem:[%s4] sm:$0xf]
      %v339 = vld [vmem:[%s4 + $0x4] sm:$0xf]
      %v340 = vld [vmem:[%s4 + $0x8] sm:$0xf]
      %v341 = vld [vmem:[%s4 + $0xc] sm:$0xf]
      %v342 = vld [vmem:[%s6] sm:$0x1]
      %v344 = vlaneseq
      %v345 = vshrl.u32 %v344, 7
      %v346 = vsub.s32 0, %v345
      %v347 = vrot.slane %v342, %v346
      %v353 = vunpack.c.l.b16 %v338
      %v354 = vunpack.c.l.b16 %v339
      %v355 = vunpack.c.l.b16 %v340
      %v356 = vunpack.c.l.b16 %v341
      %v357 = vpack.c.b16 %v354, %v353
      %v358 = vpack.c.b16 %v356, %v355
      %vm361 = vcmask 261120
      %v363 = vsel %vm361, %v329, 0
      %365 = vmatprep.subr.bf16.mxu0 0
      %366 = vmatpush1.bf16.msra.mxu0 %v357
      %367 = vmatprep.subr.bf16.mxu0 0
      %368 = vmatpush1.bf16.msra.mxu0 %v358
      %369 = vmatprep.subr.bf16.mxu0 0
      %370 = vmatpush1.bf16.msra.mxu0 0
      %371 = vmatprep.subr.bf16.mxu0 0
      %372 = vmatpush1.bf16.msra.mxu0 0
      %373 = vmatprep.subr.bf16.mxu0 0
      %374 = vmatpush1.bf16.msra.mxu0 0
      %375 = vmatprep.subr.bf16.mxu0 0
      %376 = vmatpush1.bf16.msra.mxu0 0
      %377 = vmatprep.subr.bf16.mxu0 0
      %378 = vmatpush1.bf16.msra.mxu0 0
      %379 = vmatprep.subr.bf16.mxu0 0
      %380 = vmatpush1.bf16.msra.mxu0 0
      %381 = vmatprep.subr.bf16.mxu0 0
      %382 = vmatpush1.bf16.msra.mxu0 0
      %383 = vmatprep.subr.bf16.mxu0 0
      %384 = vmatpush1.bf16.msra.mxu0 0
      %385 = vmatprep.subr.bf16.mxu0 0
      %386 = vmatpush1.bf16.msra.mxu0 0
      %387 = vmatprep.subr.bf16.mxu0 0
      %388 = vmatpush1.bf16.msra.mxu0 0
      %389 = vmatprep.subr.bf16.mxu0 0
      %390 = vmatpush1.bf16.msra.mxu0 0
      %391 = vmatprep.subr.bf16.mxu0 0
      %392 = vmatpush1.bf16.msra.mxu0 0
      %393 = vmatprep.subr.bf16.mxu0 0
      %394 = vmatpush1.bf16.msra.mxu0 0
      %395 = vmatprep.subr.bf16.mxu0 0
      %396 = vmatpush1.bf16.msra.mxu0 0
      %397 = vmatprep.mubr.bf16.mxu0 0
      %398 = vmatmul.mubr.bf16.gmra.mrb[0].mxu0 %v363
      %v399 = vpop.f32.mrb[0].mxu0
      %v400 = vadd.f32 %v347, %v399
      %v401 = vpop.f32.mrb[0].mxu0
      %v402 = vpop.f32.mrb[0].mxu0
      %v403 = vpop.f32.mrb[0].mxu0
      %404 = vdwg.mxu0
      %v405 = vld [vmem:[%s318] sm:$0x1]
      %v407 = vlaneseq
      %v408 = vshrl.u32 %v407, 7
      %v409 = vsub.s32 0, %v408
      %v410 = vrot.slane %v405, %v409
      %v416 = vunpack.c.l.b16 %v330
      %v417 = vunpack.c.l.b16 %v331
      %v418 = vunpack.c.l.b16 %v332
      %v419 = vunpack.c.l.b16 %v333
      %v420 = vpack.c.b16 %v417, %v416
      %v421 = vpack.c.b16 %v419, %v418
      %v423 = vsel %vm361, %v420, 0
      %v426 = vsel %vm361, %v421, 0
      %428 = vmatprep.subr.bf16.mxu0 0
      %429 = vmatpush1.bf16.xpose.msra.mxu0 %v423
      %430 = vmatprep.subr.bf16.mxu0 0
      %431 = vmatpush1.bf16.xpose.msra.mxu0 %v426
      %432 = vmatprep.subr.bf16.mxu0 0
      %433 = vmatpush1.bf16.xpose.msra.mxu0 0
      %434 = vmatprep.subr.bf16.mxu0 0
      %435 = vmatpush1.bf16.xpose.msra.mxu0 0
      %436 = vmatprep.subr.bf16.mxu0 0
      %437 = vmatpush1.bf16.xpose.msra.mxu0 0
      %438 = vmatprep.subr.bf16.mxu0 0
      %439 = vmatpush1.bf16.xpose.msra.mxu0 0
      %440 = vmatprep.subr.bf16.mxu0 0
      %441 = vmatpush1.bf16.xpose.msra.mxu0 0
      %442 = vmatprep.subr.bf16.mxu0 0
      %443 = vmatpush1.bf16.xpose.msra.mxu0 0
      %444 = vmatprep.subr.bf16.mxu0 0
      %445 = vmatpush1.bf16.xpose.msra.mxu0 0
      %446 = vmatprep.subr.bf16.mxu0 0
      %447 = vmatpush1.bf16.xpose.msra.mxu0 0
      %448 = vmatprep.subr.bf16.mxu0 0
      %449 = vmatpush1.bf16.xpose.msra.mxu0 0
      %450 = vmatprep.subr.bf16.mxu0 0
      %451 = vmatpush1.bf16.xpose.msra.mxu0 0
      %452 = vmatprep.subr.bf16.mxu0 0
      %453 = vmatpush1.bf16.xpose.msra.mxu0 0
      %454 = vmatprep.subr.bf16.mxu0 0
      %455 = vmatpush1.bf16.xpose.msra.mxu0 0
      %456 = vmatprep.subr.bf16.mxu0 0
      %457 = vmatpush1.bf16.xpose.msra.mxu0 0
      %458 = vmatprep.subr.bf16.mxu0 0
      %459 = vmatpush1.bf16.xpose.msra.mxu0 0
      %460 = vmatprep.mubr.bf16.mxu0 0
      %461 = vmatmul.mubr.bf16.gmra.mrb[0].mxu0 %v363
      %v462 = vpop.f32.mrb[0].mxu0
      %v463 = vadd.f32 %v410, %v462
      %v464 = vpop.f32.mrb[0].mxu0
      %v465 = vpop.f32.mrb[0].mxu0
      %v466 = vpop.f32.mrb[0].mxu0
      %467 = vdwg.mxu0
      %v468 = vsel %vm361, %v463, -inf
      %469 = vmax.xlane.f32.xlu0 %v468
      %v470 = vpop.xlane.xlu0 %469
      %v471 = vsub.f32 %v463, %v470
      %v472 = vmul.f32 %v471, 1.442695
      %v473 = vpow.pop %v472
      %v474 = vlaneseq
      %v475 = vand.u32 %v474, 127
      %vm476 = vcmask 130048
      %v477 = vsel %vm476, %v473, 0.0
      %478 = vadd.xlane.f32.xlu0 %v477
      %v479 = vpop.xlane.xlu0 %478
      %v480 = vmax.f32 %v479, 1e-20
      %v481 = vrcp.pop %v480
      %v482 = vmul.f32 %v473, %v481
      %v483 = vpack.c.bf16 %v482, %v482
      %v486 = vsel %vm476, %v483, 0
      %488 = vmatprep.subr.bf16.mxu0 0
      %489 = vmatpush1.bf16.msra.mxu0 %v420
      %490 = vmatprep.subr.bf16.mxu0 0
      %491 = vmatpush1.bf16.msra.mxu0 0
      %492 = vmatprep.subr.bf16.mxu0 0
      %493 = vmatpush1.bf16.msra.mxu0 0
      %494 = vmatprep.subr.bf16.mxu0 0
      %495 = vmatpush1.bf16.msra.mxu0 0
      %496 = vmatprep.subr.bf16.mxu0 0
      %497 = vmatpush1.bf16.msra.mxu0 0
      %498 = vmatprep.subr.bf16.mxu0 0
      %499 = vmatpush1.bf16.msra.mxu0 0
      %500 = vmatprep.subr.bf16.mxu0 0
      %501 = vmatpush1.bf16.msra.mxu0 0
      %502 = vmatprep.subr.bf16.mxu0 0
      %503 = vmatpush1.bf16.msra.mxu0 0
      %504 = vmatprep.subr.bf16.mxu0 0
      %505 = vmatpush1.bf16.msra.mxu0 0
      %506 = vmatprep.subr.bf16.mxu0 0
      %507 = vmatpush1.bf16.msra.mxu0 0
      %508 = vmatprep.subr.bf16.mxu0 0
      %509 = vmatpush1.bf16.msra.mxu0 0
      %510 = vmatprep.subr.bf16.mxu0 0
      %511 = vmatpush1.bf16.msra.mxu0 0
      %512 = vmatprep.subr.bf16.mxu0 0
      %513 = vmatpush1.bf16.msra.mxu0 0
      %514 = vmatprep.subr.bf16.mxu0 0
      %515 = vmatpush1.bf16.msra.mxu0 0
      %516 = vmatprep.subr.bf16.mxu0 0
      %517 = vmatpush1.bf16.msra.mxu0 0
      %518 = vmatprep.subr.bf16.mxu0 0
      %519 = vmatpush1.bf16.msra.mxu0 0
      %520 = vmatprep.mubr.bf16.mxu0 0
      %521 = vmatmul.mubr.bf16.gmra.mrb[0].mxu0 %v486
      %v522 = vpop.f32.mrb[0].mxu0
      %v523 = vadd.f32 0.0, %v522
      %v524 = vpop.f32.mrb[0].mxu0
      %v525 = vpop.f32.mrb[0].mxu0
      %v526 = vpop.f32.mrb[0].mxu0
      %527 = vdwg.mxu0
      %v528 = vpack.c.bf16 %v523, %v523
      %v533 = vunpack.c.l.b16 %v334
      %v534 = vunpack.c.l.b16 %v335
      %v535 = vunpack.c.l.b16 %v336
      %v536 = vunpack.c.l.b16 %v337
      %v537 = vpack.c.b16 %v534, %v533
      %v538 = vpack.c.b16 %v536, %v535
      %v542 = vsel %vm361, %v528, 0
      %544 = vmatprep.subr.bf16.mxu0 0
      %545 = vmatpush1.bf16.msra.mxu0 %v537
      %546 = vmatprep.subr.bf16.mxu0 0
      %547 = vmatpush1.bf16.msra.mxu0 %v538
      %548 = vmatprep.subr.bf16.mxu0 0
      %549 = vmatpush1.bf16.msra.mxu0 0
      %550 = vmatprep.subr.bf16.mxu0 0
      %551 = vmatpush1.bf16.msra.mxu0 0
      %552 = vmatprep.subr.bf16.mxu0 0
      %553 = vmatpush1.bf16.msra.mxu0 0
      %554 = vmatprep.subr.bf16.mxu0 0
      %555 = vmatpush1.bf16.msra.mxu0 0
      %556 = vmatprep.subr.bf16.mxu0 0
      %557 = vmatpush1.bf16.msra.mxu0 0
      %558 = vmatprep.subr.bf16.mxu0 0
      %559 = vmatpush1.bf16.msra.mxu0 0
      %560 = vmatprep.subr.bf16.mxu0 0
      %561 = vmatpush1.bf16.msra.mxu0 0
      %562 = vmatprep.subr.bf16.mxu0 0
      %563 = vmatpush1.bf16.msra.mxu0 0
      %564 = vmatprep.subr.bf16.mxu0 0
      %565 = vmatpush1.bf16.msra.mxu0 0
      %566 = vmatprep.subr.bf16.mxu0 0
      %567 = vmatpush1.bf16.msra.mxu0 0
      %568 = vmatprep.subr.bf16.mxu0 0
      %569 = vmatpush1.bf16.msra.mxu0 0
      %570 = vmatprep.subr.bf16.mxu0 0
      %571 = vmatpush1.bf16.msra.mxu0 0
      %572 = vmatprep.subr.bf16.mxu0 0
      %573 = vmatpush1.bf16.msra.mxu0 0
      %574 = vmatprep.subr.bf16.mxu0 0
      %575 = vmatpush1.bf16.msra.mxu0 0
      %576 = vmatprep.mubr.bf16.mxu0 0
      %577 = vmatmul.mubr.bf16.gmra.mrb[0].mxu0 %v542
      %v578 = vpop.f32.mrb[0].mxu0
      %v579 = vadd.f32 0.0, %v578
      %v580 = vpop.f32.mrb[0].mxu0
      %v581 = vpop.f32.mrb[0].mxu0
      %v582 = vpop.f32.mrb[0].mxu0
      %583 = vdwg.mxu0
      %v584 = vadd.f32 %v400, %v579
      %v585 = vsub.f32 0.0, %v584
      %v586 = vmul.f32 %v585, 1.442695
      %v587 = vpow.pop %v586
      %v588 = vadd.f32 %v587, 1.0
      %v589 = vrcp.pop %v588
      %v590 = vsel %vm361, %v584, -inf
      %591 = vmax.xlane.f32.xlu0 %v590
      %v592 = vpop.xlane.xlu0 %591
      %v593 = vsub.f32 %v584, %v592
      %v594 = vmul.f32 %v593, 1.442695
      %v595 = vpow.pop %v594
      %v596 = vsel %vm361, %v595, 0.0
      %597 = vadd.xlane.f32.xlu0 %v596
      %v598 = vpop.xlane.xlu0 %597
      %v599 = vrcp.pop %v598
      %v600 = vmul.f32 %v595, %v599
      %602 = vset.pattern.permute.xlu0 32
      %603 = vperm.xlu0 %602, %v589
      %v604 = vpop.permute.xlu0 %603
      %v606 = vmul.f32 %v604, %v600
      %608 = vrot.lane.b32.xlu0 %v473, 112
      %v609 = vpop.permute.xlu0 %608
      %v611 = vsel %vm476, %v609, 0.0
      %612 = vadd.xlane.f32.xlu0 %v611
      %v613 = vpop.xlane.xlu0 %612
      %v614 = vmax.f32 %v613, 1e-20
      %v615 = vrcp.pop %v614
      %v616 = vmul.f32 %v473, %v615
      %v617 = vpack.c.bf16 %v616, %v616
      %619 = vrot.lane.b32.xlu0 %v617, 112
      %v620 = vpop.permute.xlu0 %619
      %v623 = vsel %vm476, %v620, 0
      %625 = vmatprep.subr.bf16.mxu0 0
      %626 = vmatpush1.bf16.msra.mxu0 %v421
      %627 = vmatprep.subr.bf16.mxu0 0
      %628 = vmatpush1.bf16.msra.mxu0 0
      %629 = vmatprep.subr.bf16.mxu0 0
      %630 = vmatpush1.bf16.msra.mxu0 0
      %631 = vmatprep.subr.bf16.mxu0 0
      %632 = vmatpush1.bf16.msra.mxu0 0
      %633 = vmatprep.subr.bf16.mxu0 0
      %634 = vmatpush1.bf16.msra.mxu0 0
      %635 = vmatprep.subr.bf16.mxu0 0
      %636 = vmatpush1.bf16.msra.mxu0 0
      %637 = vmatprep.subr.bf16.mxu0 0
      %638 = vmatpush1.bf16.msra.mxu0 0
      %639 = vmatprep.subr.bf16.mxu0 0
      %640 = vmatpush1.bf16.msra.mxu0 0
      %641 = vmatprep.subr.bf16.mxu0 0
      %642 = vmatpush1.bf16.msra.mxu0 0
      %643 = vmatprep.subr.bf16.mxu0 0
      %644 = vmatpush1.bf16.msra.mxu0 0
      %645 = vmatprep.subr.bf16.mxu0 0
      %646 = vmatpush1.bf16.msra.mxu0 0
      %647 = vmatprep.subr.bf16.mxu0 0
      %648 = vmatpush1.bf16.msra.mxu0 0
      %649 = vmatprep.subr.bf16.mxu0 0
      %650 = vmatpush1.bf16.msra.mxu0 0
      %651 = vmatprep.subr.bf16.mxu0 0
      %652 = vmatpush1.bf16.msra.mxu0 0
      %653 = vmatprep.subr.bf16.mxu0 0
      %654 = vmatpush1.bf16.msra.mxu0 0
      %655 = vmatprep.subr.bf16.mxu0 0
      %656 = vmatpush1.bf16.msra.mxu0 0
      %657 = vmatprep.mubr.bf16.mxu0 0
      %658 = vmatmul.mubr.bf16.gmra.mrb[0].mxu0 %v623
      %v659 = vpop.f32.mrb[0].mxu0
      %v660 = vadd.f32 0.0, %v659
      %v661 = vpop.f32.mrb[0].mxu0
      %v662 = vpop.f32.mrb[0].mxu0
      %v663 = vpop.f32.mrb[0].mxu0
      %664 = vdwg.mxu0
      %v665 = vpack.c.bf16 %v660, %v660
      %v667 = vsel %vm361, %v665, 0
      %669 = vmatprep.subr.bf16.mxu0 0
      %670 = vmatpush1.bf16.msra.mxu0 %v537
      %671 = vmatprep.subr.bf16.mxu0 0
      %672 = vmatpush1.bf16.msra.mxu0 %v538
      %673 = vmatprep.subr.bf16.mxu0 0
      %674 = vmatpush1.bf16.msra.mxu0 0
      %675 = vmatprep.subr.bf16.mxu0 0
      %676 = vmatpush1.bf16.msra.mxu0 0
      %677 = vmatprep.subr.bf16.mxu0 0
      %678 = vmatpush1.bf16.msra.mxu0 0
      %679 = vmatprep.subr.bf16.mxu0 0
      %680 = vmatpush1.bf16.msra.mxu0 0
      %681 = vmatprep.subr.bf16.mxu0 0
      %682 = vmatpush1.bf16.msra.mxu0 0
      %683 = vmatprep.subr.bf16.mxu0 0
      %684 = vmatpush1.bf16.msra.mxu0 0
      %685 = vmatprep.subr.bf16.mxu0 0
      %686 = vmatpush1.bf16.msra.mxu0 0
      %687 = vmatprep.subr.bf16.mxu0 0
      %688 = vmatpush1.bf16.msra.mxu0 0
      %689 = vmatprep.subr.bf16.mxu0 0
      %690 = vmatpush1.bf16.msra.mxu0 0
      %691 = vmatprep.subr.bf16.mxu0 0
      %692 = vmatpush1.bf16.msra.mxu0 0
      %693 = vmatprep.subr.bf16.mxu0 0
      %694 = vmatpush1.bf16.msra.mxu0 0
      %695 = vmatprep.subr.bf16.mxu0 0
      %696 = vmatpush1.bf16.msra.mxu0 0
      %697 = vmatprep.subr.bf16.mxu0 0
      %698 = vmatpush1.bf16.msra.mxu0 0
      %699 = vmatprep.subr.bf16.mxu0 0
      %700 = vmatpush1.bf16.msra.mxu0 0
      %701 = vmatprep.mubr.bf16.mxu0 0
      %702 = vmatmul.mubr.bf16.gmra.mrb[0].mxu0 %v667
      %v703 = vpop.f32.mrb[0].mxu0
      %v704 = vadd.f32 0.0, %v703
      %v705 = vpop.f32.mrb[0].mxu0
      %v706 = vpop.f32.mrb[0].mxu0
      %v707 = vpop.f32.mrb[0].mxu0
      %708 = vdwg.mxu0
      %v709 = vadd.f32 %v400, %v704
      %v710 = vsub.f32 0.0, %v709
      %v711 = vmul.f32 %v710, 1.442695
      %v712 = vpow.pop %v711
      %v713 = vadd.f32 %v712, 1.0
      %v714 = vrcp.pop %v713
      %v715 = vsel %vm361, %v709, -inf
      %716 = vmax.xlane.f32.xlu0 %v715
      %v717 = vpop.xlane.xlu0 %716
      %v718 = vsub.f32 %v709, %v717
      %v719 = vmul.f32 %v718, 1.442695
      %v720 = vpow.pop %v719
      %v721 = vsel %vm361, %v720, 0.0
      %722 = vadd.xlane.f32.xlu0 %v721
      %v723 = vpop.xlane.xlu0 %722
      %v724 = vrcp.pop %v723
      %v725 = vmul.f32 %v720, %v724
      %727 = vset.pattern.permute.xlu0 32
      %728 = vperm.xlu0 %727, %v714
      %v729 = vpop.permute.xlu0 %728
      %v731 = vmul.f32 %v729, %v725
      %v732 = vmax.f32 %v584, %v709
      %v733 = vsub.f32 %v584, %v732
      %v734 = vmul.f32 %v733, 1.442695
      %v735 = vpow.pop %v734
      %v736 = vsub.f32 %v709, %v732
      %v737 = vmul.f32 %v736, 1.442695
      %v738 = vpow.pop %v737
      %v739 = vadd.f32 %v735, %v738
      %v740 = vrcp.pop %v739
      %v741 = vmul.f32 %v735, %v740
      %743 = vset.pattern.permute.xlu0 33
      %744 = vperm.xlu0 %743, %v741
      %v745 = vpop.permute.xlu0 %744
      %v747 = vmul.f32 %v745, %v606
      %v748 = vsub.f32 1.0, %v589
      %750 = vrot.lane.b32.xlu0 %v748, 1
      %v751 = vpop.permute.xlu0 %750
      %v753 = vmul.f32 %v741, %v751
      %v754 = vmul.f32 %v753, %v481
      %v755 = vmul.f32 %v738, %v740
      %757 = vset.pattern.permute.xlu0 33
      %758 = vperm.xlu0 %757, %v755
      %v759 = vpop.permute.xlu0 %758
      %v761 = vmul.f32 %v759, %v731
      %v762 = vadd.f32 %v747, %v761
      %v763 = vsub.f32 1.0, %v714
      %765 = vrot.lane.b32.xlu0 %v763, 1
      %v766 = vpop.permute.xlu0 %765
      %v768 = vmul.f32 %v755, %v766
      %v769 = vmul.f32 %v768, %v615
      %vm770 = vcmp.lt.s32.totalorder %v475, 16
      %772 = vset.pattern.permute.xlu0 33
      %773 = vperm.xlu0 %772, %v754
      %v774 = vpop.permute.xlu0 %773
      %777 = vset.pattern.permute.xlu0 33
      %778 = vperm.xlu0 %777, %v769
      %v779 = vpop.permute.xlu0 %778
      %v781 = vsel %vm770, %v774, %v779
      %v782 = vmul.f32 %v473, %v781
      %v783 = vld [vmem:[%s323] sm:$0xf]
      %v784 = vld [vmem:[%s323 + $0x4] sm:$0xf]
      %v785 = vld [vmem:[%s323 + $0x8] sm:$0xf]
      %v786 = vld [vmem:[%s323 + $0xc] sm:$0xf]
      %v787 = vld [vmem:[%s323 + $0x10] sm:$0xf]
      %v788 = vld [vmem:[%s323 + $0x14] sm:$0xf]
      %v789 = vld [vmem:[%s323 + $0x18] sm:$0xf]
      %v790 = vld [vmem:[%s323 + $0x1c] sm:$0xf]
      %v791 = vpack.c.bf16 %v782, %v782
      %v792 = vpack.c.bf16 %v762, %v762
      %v797 = vunpack.c.l.b16 %v787
      %v798 = vunpack.c.l.b16 %v788
      %v799 = vunpack.c.l.b16 %v789
      %v800 = vunpack.c.l.b16 %v790
      %v801 = vpack.c.b16 %v798, %v797
      %v802 = vpack.c.b16 %v800, %v799
      %v806 = vsel %vm361, %v792, 0
      %808 = vmatprep.subr.bf16.mxu0 0
      %809 = vmatpush1.bf16.msra.mxu0 %v801
      %810 = vmatprep.subr.bf16.mxu0 0
      %811 = vmatpush1.bf16.msra.mxu0 %v802
      %812 = vmatprep.subr.bf16.mxu0 0
      %813 = vmatpush1.bf16.msra.mxu0 0
      %814 = vmatprep.subr.bf16.mxu0 0
      %815 = vmatpush1.bf16.msra.mxu0 0
      %816 = vmatprep.subr.bf16.mxu0 0
      %817 = vmatpush1.bf16.msra.mxu0 0
      %818 = vmatprep.subr.bf16.mxu0 0
      %819 = vmatpush1.bf16.msra.mxu0 0
      %820 = vmatprep.subr.bf16.mxu0 0
      %821 = vmatpush1.bf16.msra.mxu0 0
      %822 = vmatprep.subr.bf16.mxu0 0
      %823 = vmatpush1.bf16.msra.mxu0 0
      %824 = vmatprep.subr.bf16.mxu0 0
      %825 = vmatpush1.bf16.msra.mxu0 0
      %826 = vmatprep.subr.bf16.mxu0 0
      %827 = vmatpush1.bf16.msra.mxu0 0
      %828 = vmatprep.subr.bf16.mxu0 0
      %829 = vmatpush1.bf16.msra.mxu0 0
      %830 = vmatprep.subr.bf16.mxu0 0
      %831 = vmatpush1.bf16.msra.mxu0 0
      %832 = vmatprep.subr.bf16.mxu0 0
      %833 = vmatpush1.bf16.msra.mxu0 0
      %834 = vmatprep.subr.bf16.mxu0 0
      %835 = vmatpush1.bf16.msra.mxu0 0
      %836 = vmatprep.subr.bf16.mxu0 0
      %837 = vmatpush1.bf16.msra.mxu0 0
      %838 = vmatprep.subr.bf16.mxu0 0
      %839 = vmatpush1.bf16.msra.mxu0 0
      %840 = vmatprep.mubr.bf16.mxu0 0
      %841 = vmatmul.mubr.bf16.gmra.mrb[0].mxu0 %v806
      %v842 = vpop.f32.mrb[0].mxu0
      %v843 = vadd.f32 0.0, %v842
      %v844 = vpop.f32.mrb[0].mxu0
      %v845 = vpop.f32.mrb[0].mxu0
      %v846 = vpop.f32.mrb[0].mxu0
      %847 = vdwg.mxu0
      %v852 = vunpack.c.l.b16 %v783
      %v853 = vunpack.c.l.b16 %v784
      %v854 = vunpack.c.l.b16 %v785
      %v855 = vunpack.c.l.b16 %v786
      %v856 = vpack.c.b16 %v853, %v852
      %v857 = vpack.c.b16 %v855, %v854
      %v861 = vsel %vm361, %v791, 0
      %863 = vmatprep.subr.bf16.mxu0 0
      %864 = vmatpush1.bf16.msra.mxu0 %v856
      %865 = vmatprep.subr.bf16.mxu0 0
      %866 = vmatpush1.bf16.msra.mxu0 %v857
      %867 = vmatprep.subr.bf16.mxu0 0
      %868 = vmatpush1.bf16.msra.mxu0 0
      %869 = vmatprep.subr.bf16.mxu0 0
      %870 = vmatpush1.bf16.msra.mxu0 0
      %871 = vmatprep.subr.bf16.mxu0 0
      %872 = vmatpush1.bf16.msra.mxu0 0
      %873 = vmatprep.subr.bf16.mxu0 0
      %874 = vmatpush1.bf16.msra.mxu0 0
      %875 = vmatprep.subr.bf16.mxu0 0
      %876 = vmatpush1.bf16.msra.mxu0 0
      %877 = vmatprep.subr.bf16.mxu0 0
      %878 = vmatpush1.bf16.msra.mxu0 0
      %879 = vmatprep.subr.bf16.mxu0 0
      %880 = vmatpush1.bf16.msra.mxu0 0
      %881 = vmatprep.subr.bf16.mxu0 0
      %882 = vmatpush1.bf16.msra.mxu0 0
      %883 = vmatprep.subr.bf16.mxu0 0
      %884 = vmatpush1.bf16.msra.mxu0 0
      %885 = vmatprep.subr.bf16.mxu0 0
      %886 = vmatpush1.bf16.msra.mxu0 0
      %887 = vmatprep.subr.bf16.mxu0 0
      %888 = vmatpush1.bf16.msra.mxu0 0
      %889 = vmatprep.subr.bf16.mxu0 0
      %890 = vmatpush1.bf16.msra.mxu0 0
      %891 = vmatprep.subr.bf16.mxu0 0
      %892 = vmatpush1.bf16.msra.mxu0 0
      %893 = vmatprep.subr.bf16.mxu0 0
      %894 = vmatpush1.bf16.msra.mxu0 0
      %895 = vmatprep.mubr.bf16.mxu0 0
      %896 = vmatmul.mubr.bf16.gmra.mrb[0].mxu0 %v861
      %v897 = vpop.f32.mrb[0].mxu0
      %v898 = vadd.f32 %v843, %v897
      %v899 = vpop.f32.mrb[0].mxu0
      %v900 = vpop.f32.mrb[0].mxu0
      %v901 = vpop.f32.mrb[0].mxu0
      %902 = vdwg.mxu0
      %903 = vst [vmem:[%s327] sm:$0xff] %v898
      %p904 = scmp.lt.s32.totalorder %s18, 1
      %s905 = scalar_select %p904, %s18, 1
      %s906 = smul.addr %s905, 8
      %s907 = scalar_lea.vmem %s7, %s906
      // Predicated region
      $region49: #{multi_agents_summarizer.1} parent=47 // pred_check
        %p908 = pneg %p203
      $region50: #{multi_agents_summarizer.1} parent=47 // pred_check_branch
        %910 = sbr.rel (%p908) target = $region52
      $region51: #{multi_agents_summarizer.1} parent=47 // pred_region
        _
      $region52: #{multi_agents_summarizer.1} parent=47 // pred_fallthru
        _
    $region48: #{multi_agents_summarizer.1} parent=5 // pred_fallthru
      _
    %p911 = scmp.le.s32.totalorder 2, %s13
    // Predicated region
    $region53: #{multi_agents_summarizer.1} parent=5 // pred_check
      %p912 = pneg %p911
    $region54: #{multi_agents_summarizer.1} parent=5 // pred_check_branch
      %914 = sbr.rel (%p912) target = $region56
    $region55: #{multi_agents_summarizer.1} parent=5 // pred_region
      %s915 = ssub.s32 %s13, 2
      // Predicated region
      $region57: #{multi_agents_summarizer.1} parent=55 // pred_check
        %p916 = pneg %p209
      $region58: #{multi_agents_summarizer.1} parent=55 // pred_check_branch
        %918 = sbr.rel (%p916) target = $region60
      $region59: #{multi_agents_summarizer.1} parent=55 // pred_region
        %p919 = scmp.lt.s32.totalorder %s19, 1
        %s920 = scalar_select %p919, %s19, 1
        %s921 = smul.addr %s920, 8
        %s922 = scalar_lea.vmem %s7, %s921
      $region60: #{multi_agents_summarizer.1} parent=55 // pred_fallthru
        _
    $region56: #{multi_agents_summarizer.1} parent=5 // pred_fallthru
      _
  $region6: #{multi_agents_summarizer.1} parent=0 // loop_footer
    %s17 = sadd.s32 1, %s13
  $region7: #{multi_agents_summarizer.1} parent=0 // loop_footer_branch
    %12 = sbr.rel target = $region3
  $region8: #{multi_agents_summarizer.1} parent=0 // loop_exit
    _

</llo_original>
